<compile_context>
chip_gen: v6e
topology: v6e:2x2x1
jax: 0.10.0
libtpu: 0.0.40
codegen_flags: <defaults>
</compile_context>

<pallas_src>
import functools

import jax
import jax.numpy as jnp
from jax.experimental import pallas as pl
from jax.experimental.pallas import tpu as pltpu

BIT_UNKNOWN_VAL = 0.0   # "unknown bit" sentinel used by the PyTorch module


# ---------------------------------------------------------------------------
# Fused kernel: net forward on the stacked batch + marginal-bridging loss.
#
# Stacked input rows (3B+1, L):
#   [0 , B )   : x               -> logp_x   (eval_ll)
#   [B , 2B)   : x_mask          -> logp_x_mask
#   [2B, 3B)   : x_mask_prev     -> logp_x_mask_prev + logits (only rows used)
#   [3B]       : all-unknown     -> log_z == logp_begin (deduplicated)
#
# net:  h      = relu(x @ W1 + b1)                 (3B+1, H)
#       logp   = sum(h * w2, -1) + b2              (3B+1,)
#       logits = h[2B:3B] @ W3 + b3                (B, L*K)   <- only prev rows
#
# loss: logps      = log_softmax(logits[sel_idx-window])      (masked, width K)
#       from_prev  = logps[label] + logp_x_mask_prev
#       mb_loss    = mean((logp_x_mask - from_prev)^2)
#       mb_begin   = (logp_allbits - LogZ)^2 ,  LogZ = 0
#       loss       = L * mb_loss + mb_begin
# ---------------------------------------------------------------------------
def _mam_fused_kernel(x_ref, w1_ref, b1_ref, w2_ref, b2_ref, w3_ref, b3_ref,
                      cs_ref, cp_ref, out_ref, *, B, L, K):
    LK = L * K

    # ---- shared hidden layer over all stacked rows (bf16 MXU, f32 acc) -----
    x = x_ref[...]                                              # (3B+1, L) f32
    h = jnp.dot(x.astype(jnp.bfloat16), w1_ref[...],
                preferred_element_type=jnp.float32)
    h = jnp.maximum(h + b1_ref[...], 0.0)                       # (3B+1, H) f32

    # logp head: lane reduction (avoids an N=1 MXU matmul); scalar bias in SMEM
    logp = jnp.sum(h * w2_ref[...], axis=-1, keepdims=True) + b2_ref[0]  # (3B+1, 1)

    # ---- logits only for the x_mask_prev rows ------------------------------
    h_prev = h[2 * B:3 * B, :]                                  # (B, H)
    logits_prev = (jnp.dot(h_prev.astype(jnp.bfloat16), w3_ref[...],
                           preferred_element_type=jnp.float32)
                   + b3_ref[...])                               # (B, L*K) f32

    # ---- masked log-softmax over the selected K-wide column window ---------
    # cs = sel_idx * K  (window start), cp = sel_idx * K + (x_sel - 1) (pick)
    col = jax.lax.broadcasted_iota(jnp.int32, (B, LK), 1)       # (B, L*K)
    cs = cs_ref[...]                                            # (B, 1) int32
    cp = cp_ref[...]                                            # (B, 1) int32
    sel_mask = (col >= cs) & (col < cs + K)
    pick_mask = col == cp

    m = jnp.max(jnp.where(sel_mask, logits_prev, -jnp.inf), axis=-1, keepdims=True)
    e = jnp.where(sel_mask, jnp.exp(logits_prev - m), 0.0)
    lse = m + jnp.log(jnp.sum(e, axis=-1, keepdims=True))
    picked = jnp.sum(jnp.where(pick_mask, logits_prev, 0.0), axis=-1, keepdims=True)
    picked_logp = picked - lse                                  # (B, 1)

    # ---- combine losses -----------------------------------------------------
    logp_x = logp[0:B, :]                                       # (B, 1)
    logp_x_mask = logp[B:2 * B, :]                              # (B, 1)
    logp_x_mask_prev = logp[2 * B:3 * B, :]                     # (B, 1)
    logp_allbits = logp[3 * B:3 * B + 1, :]                     # (1, 1)

    from_prev = picked_logp + logp_x_mask_prev
    diff = logp_x_mask - from_prev
    mb_loss = jnp.sum(diff * diff, axis=(0, 1), keepdims=True) * (1.0 / B)   # (1,1)
    logp_real = jnp.sum(logp_x, axis=(0, 1), keepdims=True) * (1.0 / B)      # (1,1)
    log_z = logp_allbits                                                     # (1,1)
    mb_loss_begin = logp_allbits * logp_allbits     # MSE vs LogZ = 0, 1 element
    loss = float(L) * mb_loss + mb_loss_begin                                # (1,1)

    # ---- lane-dense (8,128) output slab: scalar i lives at [i, 0] ----------
    row = jax.lax.broadcasted_iota(jnp.int32, (8, 128), 0)
    slab = jnp.where(row == 0, loss, 0.0)
    slab = jnp.where(row == 1, logp_real, slab)
    slab = jnp.where(row == 2, log_z, slab)
    slab = jnp.where(row == 3, mb_loss, slab)
    slab = jnp.where(row == 4, mb_loss_begin, slab)
    out_ref[...] = slab                                         # single unmasked store


def mam_fused_call(X_all, params, col_start, col_pick, *, B, L, K):
    """Single pallas_call: stacked net forward + marginal-bridging loss."""
    W1, b1, w2, b2, W3, b3 = params
    vmem = pl.BlockSpec(memory_space=pltpu.MemorySpace.VMEM)
    smem = pl.BlockSpec(memory_space=pltpu.MemorySpace.SMEM)
    kernel = functools.partial(_mam_fused_kernel, B=B, L=L, K=K)
    return pl.pallas_call(
        kernel,
        in_specs=[vmem, vmem, vmem, vmem, smem, vmem, vmem, vmem, vmem],
        out_specs=vmem,
        out_shape=jax.ShapeDtypeStruct((8, 128), jnp.float32),
    )(X_all, W1, b1, w2, b2, W3, b3, col_start, col_pick)


# ---------------------------------------------------------------------------
# MAM forward (glue: random order / masks in plain JAX, hot path in Pallas)
# ---------------------------------------------------------------------------
def init_net_params(key, L, K, H):
    k1, k2, k3 = jax.random.split(key, 3)
    W1 = (jax.random.normal(k1, (L, H), jnp.float32) * 0.2).astype(jnp.bfloat16)
    b1 = jnp.zeros((1, H), jnp.float32)
    w2 = jax.random.normal(k2, (1, H), jnp.float32) * 0.2        # logp head weights
    b2 = jnp.zeros((1,), jnp.float32)                            # scalar bias (SMEM)
    W3 = (jax.random.normal(k3, (H, L * K), jnp.float32) * 0.2).astype(jnp.bfloat16)
    b3 = jnp.zeros((1, L * K), jnp.float32)
    return (W1, b1, w2, b2, W3, b3)


def sample_order(key, x, gen_order="random"):
    # torch: argsort(rand_like(x), dim=-1) -> random permutation per row
    if gen_order == "random":
        u = jax.random.uniform(key, x.shape)
        return jnp.argsort(u, axis=-1).astype(jnp.int32)
    raise NotImplementedError


def mam_forward(x, key, params, *, L, K):
    """Returns (loss, logp_real, log_z, mb_loss, mb_loss_begin)."""
    B = x.shape[0]
    k_order, k_ind = jax.random.split(key)

    rand_order_tj = sample_order(k_order, x, gen_order="random")       # (B, L)

    # sample_mb_mask(sample_method='random')
    ind = jax.random.randint(k_ind, (B, 1), 1, L + 1)                  # [1, L]
    mask_curr = rand_order_tj < ind
    mask_select_prev = rand_order_tj == (ind - 1)
    mask_prev = rand_order_tj < (ind - 1)

    x_mask = jnp.where(mask_curr, x, BIT_UNKNOWN_VAL)
    x_mask_prev = jnp.where(mask_prev, x, BIT_UNKNOWN_VAL)
    allbits = jnp.full((1, L), BIT_UNKNOWN_VAL, x.dtype)

    # Stack all net invocations into one Pallas call; the all-unknown row is
    # deduplicated (serves both eval_ll's log_z and eval_mar_bl_x_begin).
    X_all = jnp.concatenate([x, x_mask, x_mask_prev, allbits], axis=0)  # (3B+1, L)

    # position selected as "prev" (exactly one True per row) and its category
    sel_idx = jnp.argmax(mask_select_prev, axis=-1).astype(jnp.int32)   # (B,)
    x_sel = jnp.take_along_axis(x, sel_idx[:, None], axis=-1)           # (B, 1)
    label = (x_sel - 1.0).astype(jnp.int32)                             # in [0, K)
    col_start = (sel_idx[:, None] * K).astype(jnp.int32)                # (B, 1)
    col_pick = col_start + label                                        # (B, 1)

    out = mam_fused_call(X_all, params, col_start, col_pick, B=B, L=L, K=K)
    loss = out[0, 0]
    logp_real = out[1, 0]
    log_z = out[2, 0]
    mb_loss = out[3, 0]
    mb_loss_begin = out[4, 0]
    return loss, logp_real, log_z, mb_loss, mb_loss_begin


if __name__ == "__main__":
    # cfg: L=8 sequence positions, K=4 categories, hidden=32, batch=2,
    #      gen_order='random', include_onpolicy=False (on-policy branch skipped)
    B, L, K, H = 2, 8, 4, 32
    root = jax.random.PRNGKey(0)
    k_param, k_x, k_fwd = jax.random.split(root, 3)

    params = init_net_params(k_param, L, K, H)
    # data rows: integer categories in {1..K} as float32
    x = jax.random.randint(k_x, (B, L), 1, K + 1).astype(jnp.float32)

    fwd = jax.jit(functools.partial(mam_forward, L=L, K=K))
    outs = fwd(x, k_fwd, params)
    jax.block_until_ready(outs)

    # TODO(synk): on-policy branch (censor_and_sample Gibbs loop) and the
    # autoregressive sample()/est_logp() procedures are sequential sampling
    # loops outside the forward hot path and are not implemented
    # (cfg.include_onpolicy=False).
    print("KERNEL_OK")
</pallas_src>

<mosaic_0001>
module attributes {stable_mosaic.version = 11 : i64} {
  func.func @_mam_fused_kernel(%arg0: memref<7x8xf32, #tpu.memory_space<vmem>>, %arg1: memref<8x32xbf16, #tpu.memory_space<vmem>>, %arg2: memref<1x32xf32, #tpu.memory_space<vmem>>, %arg3: memref<1x32xf32, #tpu.memory_space<vmem>>, %arg4: memref<1xf32, #tpu.memory_space<smem>>, %arg5: memref<32x32xbf16, #tpu.memory_space<vmem>>, %arg6: memref<1x32xf32, #tpu.memory_space<vmem>>, %arg7: memref<2x1xi32, #tpu.memory_space<vmem>>, %arg8: memref<2x1xi32, #tpu.memory_space<vmem>>, %arg9: memref<8x128xf32, #tpu.memory_space<vmem>>) attributes {dimension_semantics = [], scalar_prefetch = 0 : i64, scratch_operands = 0 : i64, tpu.core_type = #tpu.core_type<tc>} {
    %c0 = arith.constant 0 : index
    %c0_0 = arith.constant 0 : index
    %0 = vector.load %arg0[%c0, %c0_0] : memref<7x8xf32, #tpu.memory_space<vmem>>, vector<7x8xf32>
    %1 = arith.truncf %0 : vector<7x8xf32> to vector<7x8xbf16>
    %c0_1 = arith.constant 0 : index
    %c0_2 = arith.constant 0 : index
    %2 = vector.load %arg1[%c0_1, %c0_2] : memref<8x32xbf16, #tpu.memory_space<vmem>>, vector<8x32xbf16>
    %cst = arith.constant dense<0.000000e+00> : vector<7x32xf32>
    %3 = tpu.matmul %1, %2, %cst {dimension_numbers = #tpu.dot_dimension_numbers<[1], [0], [0], [1], [0, 0, 1, 1], [], []>} : vector<7x8xbf16>, vector<8x32xbf16>, vector<7x32xf32> -> vector<7x32xf32>
    %c0_3 = arith.constant 0 : index
    %c0_4 = arith.constant 0 : index
    %4 = vector.load %arg2[%c0_3, %c0_4] : memref<1x32xf32, #tpu.memory_space<vmem>>, vector<1x32xf32>
    %5 = vector.broadcast %4 : vector<1x32xf32> to vector<7x32xf32>
    %6 = arith.addf %3, %5 : vector<7x32xf32>
    %cst_5 = arith.constant 0.000000e+00 : f32
    %7 = vector.broadcast %cst_5 : f32 to vector<7x32xf32>
    %8 = arith.maximumf %6, %7 : vector<7x32xf32>
    %c0_6 = arith.constant 0 : index
    %c0_7 = arith.constant 0 : index
    %9 = vector.load %arg3[%c0_6, %c0_7] : memref<1x32xf32, #tpu.memory_space<vmem>>, vector<1x32xf32>
    %10 = vector.broadcast %9 : vector<1x32xf32> to vector<7x32xf32>
    %11 = arith.mulf %8, %10 : vector<7x32xf32>
    %cst_8 = arith.constant dense<0.000000e+00> : vector<7xf32>
    %12 = vector.multi_reduction <add>, %11, %cst_8 [1] : vector<7x32xf32> to vector<7xf32>
    %13 = vector.shape_cast %12 : vector<7xf32> to vector<7x1xf32>
    %c0_9 = arith.constant 0 : index
    %14 = memref.load %arg4[%c0_9] : memref<1xf32, #tpu.memory_space<smem>>
    %15 = vector.broadcast %14 : f32 to vector<7x1xf32>
    %16 = arith.addf %13, %15 : vector<7x1xf32>
    %17 = vector.extract_strided_slice %8 {offsets = [4, 0], sizes = [2, 32], strides = [1, 1]} : vector<7x32xf32> to vector<2x32xf32>
    %18 = arith.truncf %17 : vector<2x32xf32> to vector<2x32xbf16>
    %c0_10 = arith.constant 0 : index
    %c0_11 = arith.constant 0 : index
    %19 = vector.load %arg5[%c0_10, %c0_11] : memref<32x32xbf16, #tpu.memory_space<vmem>>, vector<32x32xbf16>
    %cst_12 = arith.constant dense<0.000000e+00> : vector<2x32xf32>
    %20 = tpu.matmul %18, %19, %cst_12 {dimension_numbers = #tpu.dot_dimension_numbers<[1], [0], [0], [1], [0, 0, 1, 1], [], []>} : vector<2x32xbf16>, vector<32x32xbf16>, vector<2x32xf32> -> vector<2x32xf32>
    %c0_13 = arith.constant 0 : index
    %c0_14 = arith.constant 0 : index
    %21 = vector.load %arg6[%c0_13, %c0_14] : memref<1x32xf32, #tpu.memory_space<vmem>>, vector<1x32xf32>
    %22 = vector.broadcast %21 : vector<1x32xf32> to vector<2x32xf32>
    %23 = arith.addf %20, %22 : vector<2x32xf32>
    %24 = tpu.iota {dimensions = array<i32: 1>} : vector<2x32xi32>
    %c0_15 = arith.constant 0 : index
    %c0_16 = arith.constant 0 : index
    %25 = vector.load %arg7[%c0_15, %c0_16] : memref<2x1xi32, #tpu.memory_space<vmem>>, vector<2x1xi32>
    %c0_17 = arith.constant 0 : index
    %c0_18 = arith.constant 0 : index
    %26 = vector.load %arg8[%c0_17, %c0_18] : memref<2x1xi32, #tpu.memory_space<vmem>>, vector<2x1xi32>
    %27 = vector.broadcast %25 : vector<2x1xi32> to vector<2x32xi32>
    %28 = arith.cmpi sge, %24, %27 : vector<2x32xi32>
    %c4_i32 = arith.constant 4 : i32
    %29 = vector.broadcast %c4_i32 : i32 to vector<2x1xi32>
    %30 = arith.addi %25, %29 : vector<2x1xi32>
    %31 = vector.broadcast %30 : vector<2x1xi32> to vector<2x32xi32>
    %32 = arith.cmpi slt, %24, %31 : vector<2x32xi32>
    %33 = arith.andi %28, %32 : vector<2x32xi1>
    %34 = vector.broadcast %26 : vector<2x1xi32> to vector<2x32xi32>
    %35 = arith.cmpi eq, %24, %34 : vector<2x32xi32>
    %cst_19 = arith.constant 0xFF800000 : f32
    %36 = vector.broadcast %cst_19 : f32 to vector<2x32xf32>
    %37 = arith.select %33, %23, %36 : vector<2x32xi1>, vector<2x32xf32>
    %cst_20 = arith.constant dense<0xFF800000> : vector<2xf32>
    %38 = vector.multi_reduction <maximumf>, %37, %cst_20 [1] : vector<2x32xf32> to vector<2xf32>
    %39 = vector.shape_cast %38 : vector<2xf32> to vector<2x1xf32>
    %40 = vector.broadcast %39 : vector<2x1xf32> to vector<2x32xf32>
    %41 = arith.subf %23, %40 : vector<2x32xf32>
    %42 = math.exp %41 : vector<2x32xf32>
    %cst_21 = arith.constant 0.000000e+00 : f32
    %43 = vector.broadcast %cst_21 : f32 to vector<2x32xf32>
    %44 = arith.select %33, %42, %43 : vector<2x32xi1>, vector<2x32xf32>
    %cst_22 = arith.constant dense<0.000000e+00> : vector<2xf32>
    %45 = vector.multi_reduction <add>, %44, %cst_22 [1] : vector<2x32xf32> to vector<2xf32>
    %46 = vector.shape_cast %45 : vector<2xf32> to vector<2x1xf32>
    %47 = math.log %46 : vector<2x1xf32>
    %48 = arith.addf %39, %47 : vector<2x1xf32>
    %cst_23 = arith.constant 0.000000e+00 : f32
    %49 = vector.broadcast %cst_23 : f32 to vector<2x32xf32>
    %50 = arith.select %35, %23, %49 : vector<2x32xi1>, vector<2x32xf32>
    %cst_24 = arith.constant dense<0.000000e+00> : vector<2xf32>
    %51 = vector.multi_reduction <add>, %50, %cst_24 [1] : vector<2x32xf32> to vector<2xf32>
    %52 = vector.shape_cast %51 : vector<2xf32> to vector<2x1xf32>
    %53 = arith.subf %52, %48 : vector<2x1xf32>
    %54 = vector.extract_strided_slice %16 {offsets = [0, 0], sizes = [2, 1], strides = [1, 1]} : vector<7x1xf32> to vector<2x1xf32>
    %55 = vector.extract_strided_slice %16 {offsets = [2, 0], sizes = [2, 1], strides = [1, 1]} : vector<7x1xf32> to vector<2x1xf32>
    %56 = vector.extract_strided_slice %16 {offsets = [4, 0], sizes = [2, 1], strides = [1, 1]} : vector<7x1xf32> to vector<2x1xf32>
    %57 = vector.extract_strided_slice %16 {offsets = [6, 0], sizes = [1, 1], strides = [1, 1]} : vector<7x1xf32> to vector<1x1xf32>
    %58 = arith.addf %53, %56 : vector<2x1xf32>
    %59 = arith.subf %55, %58 : vector<2x1xf32>
    %60 = arith.mulf %59, %59 : vector<2x1xf32>
    %61 = vector.shape_cast %60 : vector<2x1xf32> to vector<1x2x1xf32>
    %cst_25 = arith.constant dense<0.000000e+00> : vector<1xf32>
    %62 = vector.multi_reduction <add>, %61, %cst_25 [1, 2] : vector<1x2x1xf32> to vector<1xf32>
    %63 = vector.shape_cast %62 : vector<1xf32> to vector<1x1x1xf32>
    %64 = vector.extract %63[0, 0, 0] : f32 from vector<1x1x1xf32>
    %65 = vector.broadcast %64 : f32 to vector<1x1xf32>
    %cst_26 = arith.constant 5.000000e-01 : f32
    %66 = vector.broadcast %cst_26 : f32 to vector<1x1xf32>
    %67 = arith.mulf %65, %66 : vector<1x1xf32>
    %68 = vector.shape_cast %54 : vector<2x1xf32> to vector<1x2x1xf32>
    %cst_27 = arith.constant dense<0.000000e+00> : vector<1xf32>
    %69 = vector.multi_reduction <add>, %68, %cst_27 [1, 2] : vector<1x2x1xf32> to vector<1xf32>
    %70 = vector.shape_cast %69 : vector<1xf32> to vector<1x1x1xf32>
    %71 = vector.extract %70[0, 0, 0] : f32 from vector<1x1x1xf32>
    %72 = vector.broadcast %71 : f32 to vector<1x1xf32>
    %cst_28 = arith.constant 5.000000e-01 : f32
    %73 = vector.broadcast %cst_28 : f32 to vector<1x1xf32>
    %74 = arith.mulf %72, %73 : vector<1x1xf32>
    %75 = arith.mulf %57, %57 : vector<1x1xf32>
    %cst_29 = arith.constant 8.000000e+00 : f32
    %76 = vector.broadcast %cst_29 : f32 to vector<1x1xf32>
    %77 = arith.mulf %76, %67 : vector<1x1xf32>
    %78 = arith.addf %77, %75 : vector<1x1xf32>
    %79 = tpu.iota {dimensions = array<i32: 0>} : vector<8x128xi32>
    %c0_i32 = arith.constant 0 : i32
    %80 = vector.broadcast %c0_i32 : i32 to vector<8x128xi32>
    %81 = arith.cmpi eq, %79, %80 : vector<8x128xi32>
    %cst_30 = arith.constant 0.000000e+00 : f32
    %82 = vector.shape_cast %78 : vector<1x1xf32> to vector<1x1xf32>
    %83 = vector.broadcast %82 : vector<1x1xf32> to vector<8x128xf32>
    %84 = vector.broadcast %cst_30 : f32 to vector<8x128xf32>
    %85 = arith.select %81, %83, %84 : vector<8x128xi1>, vector<8x128xf32>
    %c1_i32 = arith.constant 1 : i32
    %86 = vector.broadcast %c1_i32 : i32 to vector<8x128xi32>
    %87 = arith.cmpi eq, %79, %86 : vector<8x128xi32>
    %88 = vector.shape_cast %74 : vector<1x1xf32> to vector<1x1xf32>
    %89 = vector.broadcast %88 : vector<1x1xf32> to vector<8x128xf32>
    %90 = arith.select %87, %89, %85 : vector<8x128xi1>, vector<8x128xf32>
    %c2_i32 = arith.constant 2 : i32
    %91 = vector.broadcast %c2_i32 : i32 to vector<8x128xi32>
    %92 = arith.cmpi eq, %79, %91 : vector<8x128xi32>
    %93 = vector.shape_cast %57 : vector<1x1xf32> to vector<1x1xf32>
    %94 = vector.broadcast %93 : vector<1x1xf32> to vector<8x128xf32>
    %95 = arith.select %92, %94, %90 : vector<8x128xi1>, vector<8x128xf32>
    %c3_i32 = arith.constant 3 : i32
    %96 = vector.broadcast %c3_i32 : i32 to vector<8x128xi32>
    %97 = arith.cmpi eq, %79, %96 : vector<8x128xi32>
    %98 = vector.shape_cast %67 : vector<1x1xf32> to vector<1x1xf32>
    %99 = vector.broadcast %98 : vector<1x1xf32> to vector<8x128xf32>
    %100 = arith.select %97, %99, %95 : vector<8x128xi1>, vector<8x128xf32>
    %c4_i32_31 = arith.constant 4 : i32
    %101 = vector.broadcast %c4_i32_31 : i32 to vector<8x128xi32>
    %102 = arith.cmpi eq, %79, %101 : vector<8x128xi32>
    %103 = vector.shape_cast %75 : vector<1x1xf32> to vector<1x1xf32>
    %104 = vector.broadcast %103 : vector<1x1xf32> to vector<8x128xf32>
    %105 = arith.select %102, %104, %100 : vector<8x128xi1>, vector<8x128xf32>
    %c0_32 = arith.constant 0 : index
    %c0_33 = arith.constant 0 : index
    %106 = vector.load %arg9[%c0_32, %c0_33] : memref<8x128xf32, #tpu.memory_space<vmem>>, vector<8x128xf32>
    tpu.vector_store %arg9[%c0_32, %c0_33], %105 {strides = array<i32>} : memref<8x128xf32, #tpu.memory_space<vmem>>, vector<8x128xf32>,
    return
  }
}

</mosaic_0001>

<llo_original>
// kernel: mam_forward.1
$region0: #{mam_forward.1}
  #allocation0 [shape = 'u32[]', space=smem, size = 0x4, offset = 0x4, fixed_abs, tag = 'smem constant byte address 0x4 - core index']
  #allocation1 [shape = 'u32[144,128]{1,0:T(1,128)}', space=vmem, size = 0x12000, scoped, tag = 'internal scratch']
  #allocation2 [shape = 'f32[1]{0:T(128)S(6)}', space=smem, size = 0x200, scoped, tag = 'scoped memory for mam_forward.1']
  %s0 = inlined_call_operand.vmem [shape: f32[7,8], index: 0, kind: input, shape index: {}]
  %s1 = inlined_call_operand.vmem [shape: bf16[8,32], index: 1, kind: input, shape index: {}]
  %s2 = inlined_call_operand.vmem [shape: f32[1,32], index: 2, kind: input, shape index: {}]
  %s3 = inlined_call_operand.vmem [shape: f32[1,32], index: 3, kind: input, shape index: {}]
  %s4 = inlined_call_operand.<no memory space> [shape: f32[1], index: 4, kind: input, shape index: {}]
  %s5 = inlined_call_operand.vmem [shape: bf16[32,32], index: 5, kind: input, shape index: {}]
  %s6 = inlined_call_operand.vmem [shape: f32[1,32], index: 6, kind: input, shape index: {}]
  %s7 = inlined_call_operand.vmem [shape: s32[2,1], index: 7, kind: input, shape index: {}]
  %s8 = inlined_call_operand.vmem [shape: s32[2,1], index: 8, kind: input, shape index: {}]
  %s9 = inlined_call_operand.vmem [shape: f32[8,128], index: 9, kind: output, shape index: {}]
  %s10 = sld [smem:[#allocation0]]
  $region46: #{mam_forward.1} parent=0
    _
  %s12 = ssub.s32 1, %s10
  %s13 = scalar_select 0, %s12, %s10
  %14 = sst [smem:[#allocation2]] %s4
  // Predicated region
  $region2: #{mam_forward.1} parent=0 // pred_check
    _
  $region3: #{mam_forward.1} parent=0 // pred_check_branch
    %16 = sbr.rel (0) target = $region5
  $region4: #{mam_forward.1} parent=0 // pred_region
    _
  $region5: #{mam_forward.1} parent=0 // pred_fallthru
    _
  // Predicated region
  $region6: #{mam_forward.1} parent=0 // pred_check
    _
  $region7: #{mam_forward.1} parent=0 // pred_check_branch
    %18 = sbr.rel (0) target = $region9
  $region8: #{mam_forward.1} parent=0 // pred_region
    _
  $region9: #{mam_forward.1} parent=0 // pred_fallthru
    _
  // Predicated region
  $region10: #{mam_forward.1} parent=0 // pred_check
    _
  $region11: #{mam_forward.1} parent=0 // pred_check_branch
    %20 = sbr.rel (0) target = $region13
  $region12: #{mam_forward.1} parent=0 // pred_region
    _
  $region13: #{mam_forward.1} parent=0 // pred_fallthru
    _
  // Predicated region
  $region14: #{mam_forward.1} parent=0 // pred_check
    _
  $region15: #{mam_forward.1} parent=0 // pred_check_branch
    %22 = sbr.rel (0) target = $region17
  $region16: #{mam_forward.1} parent=0 // pred_region
    _
  $region17: #{mam_forward.1} parent=0 // pred_fallthru
    _
  // Predicated region
  $region18: #{mam_forward.1} parent=0 // pred_check
    _
  $region19: #{mam_forward.1} parent=0 // pred_check_branch
    %24 = sbr.rel (0) target = $region21
  $region20: #{mam_forward.1} parent=0 // pred_region
    _
  $region21: #{mam_forward.1} parent=0 // pred_fallthru
    _
  // Predicated region
  $region22: #{mam_forward.1} parent=0 // pred_check
    _
  $region23: #{mam_forward.1} parent=0 // pred_check_branch
    %26 = sbr.rel (0) target = $region25
  $region24: #{mam_forward.1} parent=0 // pred_region
    _
  $region25: #{mam_forward.1} parent=0 // pred_fallthru
    _
  // Predicated region
  $region26: #{mam_forward.1} parent=0 // pred_check
    _
  $region27: #{mam_forward.1} parent=0 // pred_check_branch
    %28 = sbr.rel (0) target = $region29
  $region28: #{mam_forward.1} parent=0 // pred_region
    _
  $region29: #{mam_forward.1} parent=0 // pred_fallthru
    _
  // Predicated region
  $region30: #{mam_forward.1} parent=0 // pred_check
    _
  $region31: #{mam_forward.1} parent=0 // pred_check_branch
    %30 = sbr.rel (0) target = $region33
  $region32: #{mam_forward.1} parent=0 // pred_region
    _
  $region33: #{mam_forward.1} parent=0 // pred_fallthru
    _
  // Predicated region
  $region34: #{mam_forward.1} parent=0 // pred_check
    _
  $region35: #{mam_forward.1} parent=0 // pred_check_branch
    %32 = sbr.rel (0) target = $region37
  $region36: #{mam_forward.1} parent=0 // pred_region
    _
  $region37: #{mam_forward.1} parent=0 // pred_fallthru
    _
  %v34 = vld [vmem:[%s0] sm:$0x7f]
  %v35 = vpack.c.bf16 %v34, %v34
  %v36 = vld [vmem:[%s1] sm:$0xf]
  %v37 = vld [vmem:[%s2] sm:$0x1]
  %v39 = vlaneseq
  %v40 = vshrl.u32 %v39, 7
  %v41 = vsub.s32 0, %v40
  %v42 = vrot.slane %v37, %v41
  %vm44 = vcmask 64512
  %v46 = vsel %vm44, %v35, 0
  %vm48 = vcmask 1043456
  %v50 = vsel %vm48, %v36, 0
  %52 = vmatprep.subr.bf16.mxu0 0
  %53 = vmatpush1.bf16.msra.mxu0 0
  %54 = vmatprep.subr.bf16.mxu0 0
  %55 = vmatpush1.bf16.msra.mxu0 0
  %56 = vmatprep.subr.bf16.mxu0 0
  %57 = vmatpush1.bf16.msra.mxu0 0
  %58 = vmatprep.subr.bf16.mxu0 0
  %59 = vmatpush1.bf16.msra.mxu0 0
  %60 = vmatprep.subr.bf16.mxu0 0
  %61 = vmatpush1.bf16.msra.mxu0 0
  %62 = vmatprep.subr.bf16.mxu0 0
  %63 = vmatpush1.bf16.msra.mxu0 0
  %64 = vmatprep.subr.bf16.mxu0 0
  %65 = vmatpush1.bf16.msra.mxu0 0
  %66 = vmatprep.subr.bf16.mxu0 0
  %67 = vmatpush1.bf16.msra.mxu0 %v50
  %68 = vmatprep.subr.bf16.mxu0 0
  %69 = vmatpush2.bf16.msra.mxu0 0
  %70 = vmatprep.subr.bf16.mxu0 0
  %71 = vmatpush2.bf16.msra.mxu0 0
  %72 = vmatprep.subr.bf16.mxu0 0
  %73 = vmatpush2.bf16.msra.mxu0 0
  %74 = vmatprep.subr.bf16.mxu0 0
  %75 = vmatpush2.bf16.msra.mxu0 0
  %76 = vmatprep.subr.bf16.mxu0 0
  %77 = vmatpush2.bf16.msra.mxu0 0
  %78 = vmatprep.subr.bf16.mxu0 0
  %79 = vmatpush2.bf16.msra.mxu0 0
  %80 = vmatprep.subr.bf16.mxu0 0
  %81 = vmatpush2.bf16.msra.mxu0 0
  %82 = vmatprep.subr.bf16.mxu0 0
  %83 = vmatpush2.bf16.msra.mxu0 0
  %84 = vmatprep.mubr.bf16.mxu0 0
  %85 = vmatmul.mubr.bf16.gmra.mxu0 %v46
  %v86 = vpop.f32.mrf.mxu0
  %v87 = vadd.f32 %v42, %v86
  %v88 = vpop.f32.mrf.mxu0
  %v89 = vpop.f32.mrf.mxu0
  %v90 = vpop.f32.mrf.mxu0
  %91 = vdwg.mxu0
  %v92 = vmax.f32 %v87, 0.0
  %v93 = vld [vmem:[%s3] sm:$0x1]
  %v95 = vlaneseq
  %v96 = vshrl.u32 %v95, 7
  %v97 = vsub.s32 0, %v96
  %v98 = vrot.slane %v93, %v97
  %v100 = vmul.f32 %v92, %v98
  %vm101 = vcmask 260096
  %v102 = vsel %vm101, %v100, 0.0
  %103 = vadd.xlane.f32.xlu0 %v102
  %v104 = vpop.xlane.xlu0 %103
  %s105 = sld [smem:[#allocation2]]
  %v106 = vstv %s105
  %v107 = vadd.f32 %v104, %v106
  %v108 = vpack.c.bf16 %v92, %v92
  %v109 = vld [vmem:[%s5] sm:$0xf]
  %v110 = vld [vmem:[%s5 + $0x4] sm:$0xf]
  %v111 = vld [vmem:[%s5 + $0x8] sm:$0xf]
  %v112 = vld [vmem:[%s5 + $0xc] sm:$0xf]
  %v113 = vld [vmem:[%s6] sm:$0x1]
  %v115 = vlaneseq
  %v116 = vshrl.u32 %v115, 7
  %v117 = vsub.s32 0, %v116
  %v118 = vrot.slane %v113, %v117
  %v121 = vrot.slane %v108, 2
  %v126 = vunpack.c.l.b16 %v109
  %v127 = vunpack.c.l.b16 %v110
  %v128 = vunpack.c.l.b16 %v111
  %v129 = vunpack.c.l.b16 %v112
  %v130 = vpack.c.b16 %v127, %v126
  %v131 = vpack.c.b16 %v129, %v128
  %vm134 = vcmask 261120
  %v136 = vsel %vm134, %v121, 0
  %138 = vmatprep.subr.bf16.mxu0 0
  %139 = vmatpush1.bf16.msra.mxu0 0
  %140 = vmatprep.subr.bf16.mxu0 0
  %141 = vmatpush1.bf16.msra.mxu0 0
  %142 = vmatprep.subr.bf16.mxu0 0
  %143 = vmatpush1.bf16.msra.mxu0 0
  %144 = vmatprep.subr.bf16.mxu0 0
  %145 = vmatpush1.bf16.msra.mxu0 0
  %146 = vmatprep.subr.bf16.mxu0 0
  %147 = vmatpush1.bf16.msra.mxu0 0
  %148 = vmatprep.subr.bf16.mxu0 0
  %149 = vmatpush1.bf16.msra.mxu0 0
  %150 = vmatprep.subr.bf16.mxu0 0
  %151 = vmatpush1.bf16.msra.mxu0 %v131
  %152 = vmatprep.subr.bf16.mxu0 0
  %153 = vmatpush1.bf16.msra.mxu0 %v130
  %154 = vmatprep.subr.bf16.mxu0 0
  %155 = vmatpush2.bf16.msra.mxu0 0
  %156 = vmatprep.subr.bf16.mxu0 0
  %157 = vmatpush2.bf16.msra.mxu0 0
  %158 = vmatprep.subr.bf16.mxu0 0
  %159 = vmatpush2.bf16.msra.mxu0 0
  %160 = vmatprep.subr.bf16.mxu0 0
  %161 = vmatpush2.bf16.msra.mxu0 0
  %162 = vmatprep.subr.bf16.mxu0 0
  %163 = vmatpush2.bf16.msra.mxu0 0
  %164 = vmatprep.subr.bf16.mxu0 0
  %165 = vmatpush2.bf16.msra.mxu0 0
  %166 = vmatprep.subr.bf16.mxu0 0
  %167 = vmatpush2.bf16.msra.mxu0 0
  %168 = vmatprep.subr.bf16.mxu0 0
  %169 = vmatpush2.bf16.msra.mxu0 0
  %170 = vmatprep.mubr.bf16.mxu0 0
  %171 = vmatmul.mubr.bf16.gmra.mxu0 %v136
  %v172 = vpop.f32.mrf.mxu0
  %v173 = vadd.f32 %v118, %v172
  %v174 = vpop.f32.mrf.mxu0
  %v175 = vpop.f32.mrf.mxu0
  %v176 = vpop.f32.mrf.mxu0
  %177 = vdwg.mxu0
  %v178 = vlaneseq
  %v179 = vand.u32 %v178, 127
  %v180 = vld [vmem:[%s7] sm:$0x3]
  %v181 = vld [vmem:[%s8] sm:$0x3]
  %182 = vset.pattern.permute.xlu0 0
  %183 = vperm.xlu0 %182, %v180
  %v184 = vpop.permute.xlu0 %183
  %vm185 = vcmp.ge.s32.totalorder %v179, %v184
  %v186 = vadd.s32 %v180, 4
  %187 = vset.pattern.permute.xlu0 0
  %188 = vperm.xlu0 %187, %v186
  %v189 = vpop.permute.xlu0 %188
  %vm190 = vcmp.lt.s32.totalorder %v179, %v189
  %vm191 = vmand %vm185, %vm190
  %192 = vset.pattern.permute.xlu0 0
  %193 = vperm.xlu0 %192, %v181
  %v194 = vpop.permute.xlu0 %193
  %vm195 = vcmp.eq.s32.totalorder %v179, %v194
  %v196 = vsel %vm191, %v173, -inf
  %vm197 = vcmask 254976
  %v198 = vsel %vm197, %v196, -inf
  %199 = vmax.xlane.f32.xlu0 %v198
  %v200 = vpop.xlane.xlu0 %199
  %v201 = vsub.f32 %v173, %v200
  %v202 = vmul.f32 %v201, 1.442695
  %v203 = vpow.pop %v202
  %v204 = vsel %vm191, %v203, 0.0
  %v205 = vsel %vm197, %v204, 0.0
  %206 = vadd.xlane.f32.xlu0 %v205
  %v207 = vpop.xlane.xlu0 %206
  %v208 = vlog2.pop %v207
  %v209 = vmul.f32 %v208, 0.6931472
  %v210 = vadd.f32 %v200, %v209
  %v211 = vsel %vm195, %v173, 0.0
  %v212 = vsel %vm197, %v211, 0.0
  %213 = vadd.xlane.f32.xlu0 %v212
  %v214 = vpop.xlane.xlu0 %213
  %v215 = vsub.f32 %v214, %v210
  %v217 = vrot.slane %v107, 4
  %v219 = vadd.f32 %v215, %v217
  %v221 = vrot.slane %v219, 6
  %v223 = vsub.f32 %v107, %v221
  %v224 = vmul.f32 %v223, %v223
  %v226 = vrot.slane %v224, 2
  %vm228 = vcmask 1024
  %v229 = vsel %vm228, %v226, 0.0
  %230 = vadd.xlane.f32.xlu0 %v229
  %v231 = vpop.xlane.xlu0 %230
  %v232 = vrot.slane %v231, 4
  %v233 = vadd.f32 %v231, %v232
  %v234 = vrot.slane %v233, 2
  %v235 = vadd.f32 %v233, %v234
  %v236 = vrot.slane %v235, 1
  %v237 = vadd.f32 %v235, %v236
  %s238 = vtos %v237
  %v239 = vstv %s238
  %v240 = vmul.f32 %v239, 0.5
  %v241 = vsel %vm228, %v107, 0.0
  %242 = vadd.xlane.f32.xlu0 %v241
  %v243 = vpop.xlane.xlu0 %242
  %v244 = vrot.slane %v243, 4
  %v245 = vadd.f32 %v243, %v244
  %v246 = vrot.slane %v245, 2
  %v247 = vadd.f32 %v245, %v246
  %v248 = vrot.slane %v247, 1
  %v249 = vadd.f32 %v247, %v248
  %s250 = vtos %v249
  %v251 = vstv %s250
  %v252 = vmul.f32 %v251, 0.5
  %v253 = vmul.f32 %v107, %v107
  %v254 = vmul.f32 %v240, 8.0
  %v255 = vadd.f32 %v254, %v253
  %v256 = vlaneseq
  %v257 = vshrl.u32 %v256, 7
  %vm258 = vcmp.eq.s32.totalorder %v257, 0
  %v259 = vlaneseq
  %v260 = vshrl.u32 %v259, 7
  %v261 = vsub.s32 6, %v260
  %v262 = vrot.slane %v255, %v261
  %v263 = vsel %vm258, %v262, 0.0
  %vm264 = vcmp.eq.s32.totalorder %v257, 1
  %v265 = vsel %vm264, %v252, %v263
  %vm266 = vcmp.eq.s32.totalorder %v257, 2
  %v267 = vlaneseq
  %v268 = vshrl.u32 %v267, 7
  %v269 = vsub.s32 6, %v268
  %v270 = vrot.slane %v107, %v269
  %v271 = vsel %vm266, %v270, %v265
  %vm272 = vcmp.eq.s32.totalorder %v257, 3
  %v273 = vsel %vm272, %v240, %v271
  %vm274 = vcmp.eq.s32.totalorder %v257, 4
  %v275 = vlaneseq
  %v276 = vshrl.u32 %v275, 7
  %v277 = vsub.s32 6, %v276
  %v278 = vrot.slane %v253, %v277
  %v279 = vsel %vm274, %v278, %v273
  %280 = vst [vmem:[%s9] sm:$0xff] %v279
  // Predicated region
  $region38: #{mam_forward.1} parent=0 // pred_check
    _
  $region39: #{mam_forward.1} parent=0 // pred_check_branch
    %282 = sbr.rel (0) target = $region41
  $region40: #{mam_forward.1} parent=0 // pred_region
    _
  $region41: #{mam_forward.1} parent=0 // pred_fallthru
    _
  // Predicated region
  $region42: #{mam_forward.1} parent=0 // pred_check
    _
  $region43: #{mam_forward.1} parent=0 // pred_check_branch
    %284 = sbr.rel (0) target = $region45
  $region44: #{mam_forward.1} parent=0 // pred_region
    _
  $region45: #{mam_forward.1} parent=0 // pred_fallthru
    _

</llo_original>
